<compile_context>
chip_gen: v7x
topology: tpu7x:2x2x1
jax: 0.10.0
libtpu: 0.0.40
codegen_flags: <defaults>
</compile_context>

<pallas_src>
import functools

import jax
import jax.numpy as jnp
from jax.experimental import pallas as pl
from jax.experimental.pallas import tpu as pltpu

_LANES = 512                         # lane-dense last dim (multiple of 128)
_MAX_BLOCK_ROWS = 512                # 512 x 512 x 4B = 1 MiB per f32 block
_FUSED_MAX_BYTES = 2 * 1024 * 1024   # single-block fused-path threshold
_VMEM_LIMIT = 32 * 1024 * 1024       # <= scoped VMEM on v5e/v6e/v7x


def _cdiv(a, b):
    return (a + b - 1) // b


def _round_up(x, m):
    return _cdiv(x, m) * m


def _sublane_multiple(dtype):
    # native tiles: f32 (8,128), bf16 (16,128), int8/fp8 (32,128)
    return 8 * max(1, 4 // jnp.dtype(dtype).itemsize)


def _pick_tile_rows(total, sub_mult):
    rows = _round_up(_cdiv(total, _LANES), sub_mult)
    num_blocks = max(1, _cdiv(rows, _MAX_BLOCK_ROWS))
    return _round_up(_cdiv(rows, num_blocks), sub_mult)


def _to_slab(target, rows_padded):
    """Flatten row-major into a lane-dense (rows_padded, _LANES) slab.

    Padding replicates the last element (mode='edge'), which is neutral for
    min/max and gets sliced off after quantization.
    """
    # TODO(synk): when the flat size is ragged, jnp.pad materializes a copy of
    # the whole tensor; a BoundedSlice-based in-kernel tail would avoid it.
    flat = target.reshape(-1)
    pad = rows_padded * _LANES - flat.shape[0]
    if pad:
        flat = jnp.pad(flat, (0, pad), mode="edge")
    return flat.reshape(rows_padded, _LANES)


def _running_range_update(old_min, old_max, obs_min, obs_max, momentum):
    """Same branch structure as the PyTorch buffer update."""
    same = old_min == old_max
    if momentum == -1:
        new_min = jnp.where(same, old_min + obs_min,
                            jnp.minimum(old_min, obs_min))
        new_max = jnp.where(same, old_max + obs_max,
                            jnp.maximum(old_max, obs_max))
    else:
        m = momentum
        new_min = jnp.where(same, old_min + obs_min,
                            old_min * m + obs_min * (1.0 - m))
        new_max = jnp.where(same, old_max + obs_max,
                            old_max * m + obs_max * (1.0 - m))
    return new_min, new_max


# ---------------------------------------------------------------------------
# Fused kernel (small tensors): min/max + buffer update + scale + fake-quant
# in a single pass over a VMEM-resident slab.
# ---------------------------------------------------------------------------
def _make_fused_kernel(activation_bit, act_range_momentum, running_stat):
    n = float(2 ** (activation_bit - 1) - 1)

    def kernel(xmin_ref, xmax_ref, x_ref, o_ref,
               newmin_ref, newmax_ref, scale_ref):
        old_min = xmin_ref[0]
        old_max = xmax_ref[0]
        x = x_ref[...].astype(jnp.float32)

        if running_stat:
            obs_min = jnp.min(x)
            obs_max = jnp.max(x)
            new_min, new_max = _running_range_update(
                old_min, old_max, obs_min, obs_max, act_range_momentum)
        else:
            new_min, new_max = old_min, old_max

        sat = jnp.maximum(jnp.abs(new_min), jnp.abs(new_max))
        scale = jnp.maximum(sat, 1e-8) / n

        newmin_ref[0] = new_min
        newmax_ref[0] = new_max
        scale_ref[0] = scale

        q = jnp.clip(jnp.round(x / scale), -n - 1.0, n)
        o_ref[...] = (q * scale).astype(o_ref.dtype)

    return kernel


def _quant_act_fused(x2d, x_min_buf, x_max_buf, activation_bit,
                     act_range_momentum, running_stat):
    r, c = x2d.shape
    nbytes = x2d.size * x2d.dtype.itemsize
    kernel = _make_fused_kernel(activation_bit, act_range_momentum,
                                running_stat)
    return pl.pallas_call(
        kernel,
        out_shape=(
            jax.ShapeDtypeStruct((r, c), x2d.dtype),
            jax.ShapeDtypeStruct((1,), jnp.float32),
            jax.ShapeDtypeStruct((1,), jnp.float32),
            jax.ShapeDtypeStruct((1,), jnp.float32),
        ),
        grid_spec=pltpu.PrefetchScalarGridSpec(
            num_scalar_prefetch=2,
            grid=(1,),
            in_specs=[pl.BlockSpec((r, c), lambda i, *_: (0, 0))],
            out_specs=(
                pl.BlockSpec((r, c), lambda i, *_: (0, 0)),
                pl.BlockSpec(memory_space=pltpu.SMEM),
                pl.BlockSpec(memory_space=pltpu.SMEM),
                pl.BlockSpec(memory_space=pltpu.SMEM),
            ),
        ),
        compiler_params=pltpu.CompilerParams(
            dimension_semantics=("arbitrary",),
            vmem_limit_bytes=_VMEM_LIMIT),
        cost_estimate=pl.CostEstimate(
            flops=6 * x2d.size, transcendentals=0, bytes_accessed=2 * nbytes),
    )(x_min_buf, x_max_buf, x2d)


# ---------------------------------------------------------------------------
# Kernel 1 (large tensors): global min/max via a VMEM elementwise accumulator
# (VPU only per tile); at the last grid step, a single XLU tree reduce plus
# the running-range momentum update and scale computation (SMEM outputs).
# ---------------------------------------------------------------------------
def _make_minmax_scale_kernel(activation_bit, act_range_momentum):
    n = float(2 ** (activation_bit - 1) - 1)

    def kernel(xmin_ref, xmax_ref, x_ref,
               newmin_ref, newmax_ref, scale_ref,
               vmin_ref, vmax_ref):
        @pl.when(pl.program_id(0) == 0)
        def _():
            vmin_ref[...] = jnp.full(vmin_ref.shape, jnp.inf, jnp.float32)
            vmax_ref[...] = jnp.full(vmax_ref.shape, -jnp.inf, jnp.float32)

        x = x_ref[...].astype(jnp.float32)
        vmin_ref[...] = jnp.minimum(vmin_ref[...], x)
        vmax_ref[...] = jnp.maximum(vmax_ref[...], x)

        @pl.when(pl.program_id(0) == pl.num_programs(0) - 1)
        def _():
            obs_min = jnp.min(vmin_ref[...])
            obs_max = jnp.max(vmax_ref[...])
            old_min = xmin_ref[0]
            old_max = xmax_ref[0]
            new_min, new_max = _running_range_update(
                old_min, old_max, obs_min, obs_max, act_range_momentum)
            sat = jnp.maximum(jnp.abs(new_min), jnp.abs(new_max))
            newmin_ref[0] = new_min
            newmax_ref[0] = new_max
            scale_ref[0] = jnp.maximum(sat, 1e-8) / n

    return kernel


def _minmax_scale_pallas(x2d, x_min_buf, x_max_buf, tile_rows,
                         activation_bit, act_range_momentum):
    r, c = x2d.shape
    nbytes = x2d.size * x2d.dtype.itemsize
    # TODO(synk): emit per-core partial min/max so this axis can be marked
    # "parallel" and sharded across v7x's two TensorCores.
    return pl.pallas_call(
        _make_minmax_scale_kernel(activation_bit, act_range_momentum),
        out_shape=(
            jax.ShapeDtypeStruct((1,), jnp.float32),
            jax.ShapeDtypeStruct((1,), jnp.float32),
            jax.ShapeDtypeStruct((1,), jnp.float32),
        ),
        grid_spec=pltpu.PrefetchScalarGridSpec(
            num_scalar_prefetch=2,
            grid=(r // tile_rows,),
            in_specs=[pl.BlockSpec((tile_rows, c), lambda i, *_: (i, 0))],
            out_specs=(
                pl.BlockSpec(memory_space=pltpu.SMEM),
                pl.BlockSpec(memory_space=pltpu.SMEM),
                pl.BlockSpec(memory_space=pltpu.SMEM),
            ),
            scratch_shapes=[
                pltpu.VMEM((tile_rows, c), jnp.float32),
                pltpu.VMEM((tile_rows, c), jnp.float32),
            ],
        ),
        compiler_params=pltpu.CompilerParams(
            dimension_semantics=("arbitrary",),
            vmem_limit_bytes=_VMEM_LIMIT),
        cost_estimate=pl.CostEstimate(
            flops=2 * x2d.size, transcendentals=0, bytes_accessed=nbytes),
    )(x_min_buf, x_max_buf, x2d)


# ---------------------------------------------------------------------------
# Kernel 2 (large tensors): symmetric fake-quantization with a scalar scale.
# ---------------------------------------------------------------------------
def _make_quantize_kernel(activation_bit):
    n = float(2 ** (activation_bit - 1) - 1)

    def kernel(scale_ref, x_ref, o_ref):
        s = scale_ref[0]
        x = x_ref[...].astype(jnp.float32)
        q = jnp.clip(jnp.round(x / s), -n - 1.0, n)
        o_ref[...] = (q * s).astype(o_ref.dtype)

    return kernel


def _quantize_pallas(x2d, scale, tile_rows, activation_bit):
    r, c = x2d.shape
    nbytes = x2d.size * x2d.dtype.itemsize
    return pl.pallas_call(
        _make_quantize_kernel(activation_bit),
        out_shape=jax.ShapeDtypeStruct((r, c), x2d.dtype),
        grid_spec=pltpu.PrefetchScalarGridSpec(
            num_scalar_prefetch=1,
            grid=(r // tile_rows,),
            in_specs=[pl.BlockSpec((tile_rows, c), lambda i, s: (i, 0))],
            out_specs=pl.BlockSpec((tile_rows, c), lambda i, s: (i, 0)),
        ),
        compiler_params=pltpu.CompilerParams(
            dimension_semantics=("parallel",),
            vmem_limit_bytes=_VMEM_LIMIT),
        cost_estimate=pl.CostEstimate(
            flops=4 * x2d.size, transcendentals=0, bytes_accessed=2 * nbytes),
    )(scale, x2d)


# ---------------------------------------------------------------------------
# QuantAct module wrapper (stateless functional version of the nn.Module).
# ---------------------------------------------------------------------------
def quant_act_init_state():
    # register_buffer('x_min', zeros(1)); register_buffer('x_max', zeros(1))
    return (jnp.zeros((1,), jnp.float32), jnp.zeros((1,), jnp.float32))


@functools.partial(
    jax.jit,
    static_argnames=("activation_bit", "act_range_momentum",
                     "full_precision_flag", "running_stat",
                     "fused_max_bytes"))
def quant_act_forward(target, state, *, activation_bit=8,
                      act_range_momentum=0.99, full_precision_flag=False,
                      running_stat=True, fused_max_bytes=_FUSED_MAX_BYTES):
    """Returns ((quantized_activation, act_scaling_factor), new_state)."""
    x_min_buf = state[0].astype(jnp.float32)
    x_max_buf = state[1].astype(jnp.float32)

    total = target.size
    itemsize = jnp.dtype(target.dtype).itemsize
    sub_mult = _sublane_multiple(target.dtype)
    n = float(2 ** (activation_bit - 1) - 1)

    # ---- small-tensor fused path: one HBM read + one write, one kernel ----
    if not full_precision_flag:
        rows_full = _round_up(_cdiv(total, _LANES), sub_mult)
        if rows_full * _LANES * itemsize <= fused_max_bytes:
            x2d = _to_slab(target, rows_full)
            out2d, new_min, new_max, scale = _quant_act_fused(
                x2d, x_min_buf, x_max_buf, activation_bit,
                act_range_momentum, running_stat)
            out = out2d.reshape(-1)[:total].reshape(target.shape)
            return (out, scale), (new_min, new_max)

    # ---- large-tensor two-pass path (or full-precision stats update) ----
    tile_rows = _pick_tile_rows(total, sub_mult)
    rows_p = _round_up(_cdiv(total, _LANES), tile_rows)
    x2d = _to_slab(target, rows_p)

    if running_stat:
        # min/max + running-range momentum update + scale, all in-kernel.
        new_min, new_max, act_scaling_factor = _minmax_scale_pallas(
            x2d, x_min_buf, x_max_buf, tile_rows,
            activation_bit, act_range_momentum)
        x_min_buf, x_max_buf = new_min, new_max
    else:
        # fixed range: scale from the existing (1,)-shaped buffers.
        sat = jnp.maximum(jnp.abs(x_min_buf), jnp.abs(x_max_buf))
        act_scaling_factor = jnp.maximum(sat, 1e-8) / n

    if full_precision_flag:
        return target, (x_min_buf, x_max_buf)

    out2d = _quantize_pallas(x2d, act_scaling_factor, tile_rows,
                             activation_bit)
    out = out2d.reshape(-1)[:total].reshape(target.shape)
    return (out, act_scaling_factor), (x_min_buf, x_max_buf)


# ---------------------------------------------------------------------------
if __name__ == "__main__":
    k1, k2, k3 = jax.random.split(jax.random.PRNGKey(0), 3)
    n = float(2 ** 7 - 1)

    def ref_forward(x, xmin_b, xmax_b, momentum=0.99):
        obs_min, obs_max = jnp.min(x), jnp.max(x)
        same = xmin_b == xmax_b
        new_min = jnp.where(same, xmin_b + obs_min,
                            xmin_b * momentum + obs_min * (1.0 - momentum))
        new_max = jnp.where(same, xmax_b + obs_max,
                            xmax_b * momentum + obs_max * (1.0 - momentum))
        scale = jnp.clip(jnp.maximum(jnp.abs(new_min), jnp.abs(new_max)),
                         1e-8, None) / n
        out = jnp.clip(jnp.round(x / scale), -n - 1.0, n) * scale
        return out, scale, new_min, new_max

    # --- test 1: small NCHW activation, fused single-kernel path ---
    x1 = jax.random.normal(k1, (2, 4, 16, 16), dtype=jnp.float32)
    state = quant_act_init_state()
    (q1, s1), state = quant_act_forward(x1, state)
    q1 = jax.block_until_ready(q1)
    r1, rs1, rmin1, rmax1 = ref_forward(x1, 0.0, 0.0)
    assert q1.shape == x1.shape and q1.dtype == x1.dtype
    assert s1.shape == (1,)
    assert jnp.allclose(s1[0], rs1, rtol=1e-6, atol=1e-8)
    assert jnp.allclose(q1, r1, rtol=1e-5, atol=1e-6)
    assert jnp.allclose(state[0][0], rmin1, rtol=1e-6, atol=1e-8)
    assert jnp.allclose(state[1][0], rmax1, rtol=1e-6, atol=1e-8)

    # --- test 2: second step exercises the momentum buffer update (fused) ---
    x2 = jax.random.normal(k2, (2, 4, 16, 16), dtype=jnp.float32) * 2.0
    (q2, s2), state2 = quant_act_forward(x2, state)
    q2 = jax.block_until_ready(q2)
    r2, rs2, _, _ = ref_forward(x2, state[0][0], state[1][0])
    assert jnp.allclose(s2[0], rs2, rtol=1e-6, atol=1e-8)
    assert jnp.allclose(q2, r2, rtol=1e-5, atol=1e-6)

    # --- test 3: ragged size, forced two-pass (minmax + quantize) path ---
    x3 = jax.random.normal(k3, (3, 5, 17, 19), dtype=jnp.float32)
    (q3, s3), st3 = quant_act_forward(x3, quant_act_init_state(),
                                      fused_max_bytes=0)
    q3 = jax.block_until_ready(q3)
    r3, rs3, rmin3, rmax3 = ref_forward(x3, 0.0, 0.0)
    assert q3.shape == x3.shape
    assert jnp.allclose(s3[0], rs3, rtol=1e-6, atol=1e-8)
    assert jnp.allclose(q3, r3, rtol=1e-5, atol=1e-6)
    assert jnp.allclose(st3[0][0], rmin3, rtol=1e-6, atol=1e-8)
    assert jnp.allclose(st3[1][0], rmax3, rtol=1e-6, atol=1e-8)

    # --- test 4: two-pass path, in-kernel momentum update on warm buffers ---
    x4 = jax.random.normal(k2, (3, 5, 17, 19), dtype=jnp.float32) * 3.0
    (q4, s4), st4 = quant_act_forward(x4, st3, fused_max_bytes=0)
    q4 = jax.block_until_ready(q4)
    r4, rs4, rmin4, rmax4 = ref_forward(x4, st3[0][0], st3[1][0])
    assert jnp.allclose(s4[0], rs4, rtol=1e-6, atol=1e-8)
    assert jnp.allclose(q4, r4, rtol=1e-5, atol=1e-6)
    assert jnp.allclose(st4[0][0], rmin4, rtol=1e-6, atol=1e-8)
    assert jnp.allclose(st4[1][0], rmax4, rtol=1e-6, atol=1e-8)

    print("KERNEL_OK")
</pallas_src>

<mosaic_0001>
module attributes {stable_mosaic.version = 11 : i64} {
  func.func @kernel(%arg0: i32, %arg1: memref<1xf32, #tpu.memory_space<smem>>, %arg2: memref<1xf32, #tpu.memory_space<smem>>, %arg3: memref<8x512xf32, #tpu.memory_space<vmem>>, %arg4: memref<8x512xf32, #tpu.memory_space<vmem>>, %arg5: memref<1xf32, #tpu.memory_space<smem>>, %arg6: memref<1xf32, #tpu.memory_space<smem>>, %arg7: memref<1xf32, #tpu.memory_space<smem>>) attributes {dimension_semantics = [#tpu.dimension_semantics<arbitrary>], iteration_bounds = array<i64: 1>, scalar_prefetch = 2 : i64, scratch_operands = 0 : i64, tpu.core_type = #tpu.core_type<tc>, window_params = [{pipeline_mode = #tpu.pipeline_mode<synchronous>, transform_indices = @transform_0, window_bounds = array<i64: 8, 512>}, {pipeline_mode = #tpu.pipeline_mode<synchronous>, transform_indices = @transform_1, window_bounds = array<i64: 8, 512>}, {transform_indices = @transform_2, window_bounds = array<i64: 1>}, {transform_indices = @transform_3, window_bounds = array<i64: 1>}, {transform_indices = @transform_4, window_bounds = array<i64: 1>}]} {
    %c0 = arith.constant 0 : index
    %0 = memref.load %arg1[%c0] : memref<1xf32, #tpu.memory_space<smem>>
    %c0_0 = arith.constant 0 : index
    %1 = memref.load %arg2[%c0_0] : memref<1xf32, #tpu.memory_space<smem>>
    %c0_1 = arith.constant 0 : index
    %c0_2 = arith.constant 0 : index
    %2 = vector.load %arg3[%c0_1, %c0_2] : memref<8x512xf32, #tpu.memory_space<vmem>>, vector<8x512xf32>
    %3 = vector.shape_cast %2 : vector<8x512xf32> to vector<1x8x512xf32>
    %cst = arith.constant dense<0x7F800000> : vector<1xf32>
    %4 = vector.multi_reduction <minimumf>, %3, %cst [1, 2] : vector<1x8x512xf32> to vector<1xf32>
    %5 = vector.shape_cast %4 : vector<1xf32> to vector<1x1x1xf32>
    %6 = vector.extract %5[0, 0, 0] : f32 from vector<1x1x1xf32>
    %7 = vector.shape_cast %2 : vector<8x512xf32> to vector<1x8x512xf32>
    %cst_3 = arith.constant dense<0xFF800000> : vector<1xf32>
    %8 = vector.multi_reduction <maximumf>, %7, %cst_3 [1, 2] : vector<1x8x512xf32> to vector<1xf32>
    %9 = vector.shape_cast %8 : vector<1xf32> to vector<1x1x1xf32>
    %10 = vector.extract %9[0, 0, 0] : f32 from vector<1x1x1xf32>
    %11 = arith.cmpf oeq, %0, %1 : f32
    %12 = arith.addf %0, %6 : f32
    %cst_4 = arith.constant 9.900000e-01 : f32
    %13 = arith.mulf %0, %cst_4 : f32
    %cst_5 = arith.constant 0.00999999977 : f32
    %14 = arith.mulf %6, %cst_5 : f32
    %15 = arith.addf %13, %14 : f32
    %16 = arith.select %11, %12, %15 : f32
    %17 = arith.addf %1, %10 : f32
    %cst_6 = arith.constant 9.900000e-01 : f32
    %18 = arith.mulf %1, %cst_6 : f32
    %cst_7 = arith.constant 0.00999999977 : f32
    %19 = arith.mulf %10, %cst_7 : f32
    %20 = arith.addf %18, %19 : f32
    %21 = arith.select %11, %17, %20 : f32
    %22 = math.absf %16 : f32
    %23 = math.absf %21 : f32
    %24 = arith.maximumf %22, %23 : f32
    %cst_8 = arith.constant 9.99999993E-9 : f32
    %25 = arith.maximumf %24, %cst_8 : f32
    %cst_9 = arith.constant 1.270000e+02 : f32
    %26 = arith.divf %25, %cst_9 : f32
    %c0_10 = arith.constant 0 : index
    %27 = memref.load %arg5[%c0_10] : memref<1xf32, #tpu.memory_space<smem>>
    memref.store %16, %arg5[%c0_10] : memref<1xf32, #tpu.memory_space<smem>>
    %c0_11 = arith.constant 0 : index
    %28 = memref.load %arg6[%c0_11] : memref<1xf32, #tpu.memory_space<smem>>
    memref.store %21, %arg6[%c0_11] : memref<1xf32, #tpu.memory_space<smem>>
    %c0_12 = arith.constant 0 : index
    %29 = memref.load %arg7[%c0_12] : memref<1xf32, #tpu.memory_space<smem>>
    memref.store %26, %arg7[%c0_12] : memref<1xf32, #tpu.memory_space<smem>>
    %30 = vector.broadcast %26 : f32 to vector<8x512xf32>
    %31 = arith.divf %2, %30 : vector<8x512xf32>
    %32 = math.roundeven %31 : vector<8x512xf32>
    %cst_13 = arith.constant -1.280000e+02 : f32
    %cst_14 = arith.constant 1.270000e+02 : f32
    %33 = vector.broadcast %cst_13 : f32 to vector<8x512xf32>
    %34 = arith.maximumf %33, %32 : vector<8x512xf32>
    %35 = vector.broadcast %cst_14 : f32 to vector<8x512xf32>
    %36 = arith.minimumf %35, %34 : vector<8x512xf32>
    %37 = vector.broadcast %26 : f32 to vector<8x512xf32>
    %38 = arith.mulf %36, %37 : vector<8x512xf32>
    %c0_15 = arith.constant 0 : index
    %c0_16 = arith.constant 0 : index
    %39 = vector.load %arg4[%c0_15, %c0_16] : memref<8x512xf32, #tpu.memory_space<vmem>>, vector<8x512xf32>
    tpu.vector_store %arg4[%c0_15, %c0_16], %38 {strides = array<i32>} : memref<8x512xf32, #tpu.memory_space<vmem>>, vector<8x512xf32>,
    return
  }
  func.func @transform_0(%arg0: i32, %arg1: memref<1xf32, #tpu.memory_space<smem>>, %arg2: memref<1xf32, #tpu.memory_space<smem>>) -> (i32, i32) {
    %c0_i32 = arith.constant 0 : i32
    %c0_i32_0 = arith.constant 0 : i32
    %c0_i32_1 = arith.constant 0 : i32
    return %c0_i32, %c0_i32_0 : i32, i32
  }
  func.func @transform_1(%arg0: i32, %arg1: memref<1xf32, #tpu.memory_space<smem>>, %arg2: memref<1xf32, #tpu.memory_space<smem>>) -> (i32, i32) {
    %c0_i32 = arith.constant 0 : i32
    %c0_i32_0 = arith.constant 0 : i32
    %c0_i32_1 = arith.constant 0 : i32
    return %c0_i32, %c0_i32_0 : i32, i32
  }
  func.func @transform_2(%arg0: i32, %arg1: memref<1xf32, #tpu.memory_space<smem>>, %arg2: memref<1xf32, #tpu.memory_space<smem>>) -> i32 {
    %c0_i32 = arith.constant 0 : i32
    %c0_i32_0 = arith.constant 0 : i32
    return %c0_i32 : i32
  }
  func.func @transform_3(%arg0: i32, %arg1: memref<1xf32, #tpu.memory_space<smem>>, %arg2: memref<1xf32, #tpu.memory_space<smem>>) -> i32 {
    %c0_i32 = arith.constant 0 : i32
    %c0_i32_0 = arith.constant 0 : i32
    return %c0_i32 : i32
  }
  func.func @transform_4(%arg0: i32, %arg1: memref<1xf32, #tpu.memory_space<smem>>, %arg2: memref<1xf32, #tpu.memory_space<smem>>) -> i32 {
    %c0_i32 = arith.constant 0 : i32
    %c0_i32_0 = arith.constant 0 : i32
    return %c0_i32 : i32
  }
}

</mosaic_0001>

<llo_original>
// kernel: quant_act_forward.1
$region0: #{quant_act_forward.1}
  #allocation0 [shape = 'u32[]', space=smem, size = 0x4, offset = 0x4, fixed_abs, tag = 'smem constant byte address 0x4 - core index']
  #allocation1 [shape = 'u32[144,128]{1,0:T(1,128)}', space=vmem, size = 0x12000, scoped, tag = 'internal scratch']
  #allocation2 [shape = 's32[1]{0}', space=sflag, size = 0x4, scoped, tag = 'scoped memory for quant_act_forward.1']
  #allocation3 [shape = 'f32[1]{0:T(128)S(6)}', space=smem, size = 0x200, scoped, tag = 'prefetched SMEM operand 0']
  #allocation4 [shape = 'f32[1]{0:T(128)S(6)}', space=smem, size = 0x200, scoped, tag = 'prefetched SMEM operand 1']
  %s0 = inlined_call_operand.<no memory space> [shape: f32[1], index: 0, kind: input, shape index: {}]
  %s1 = inlined_call_operand.<no memory space> [shape: f32[1], index: 1, kind: input, shape index: {}]
  %s2 = inlined_call_operand.vmem [shape: f32[8,512], index: 2, kind: input, shape index: {}]
  %s3 = inlined_call_operand.vmem [shape: f32[8,512], index: 3, kind: output, shape index: {0}]
  %s4 = inlined_call_operand.hbm [shape: f32[1], index: 4, kind: output, shape index: {1}]
  %s5 = inlined_call_operand.hbm [shape: f32[1], index: 5, kind: output, shape index: {2}]
  %s6 = inlined_call_operand.hbm [shape: f32[1], index: 6, kind: output, shape index: {3}]
  %7 = xla_tuple %s3, %s4, %s5, %s6
  %s8 = sld [smem:[#allocation0]]
  $region38: #{quant_act_forward.1} parent=0
    _
  %s10 = ssub.s32 1, %s8
  %s11 = scalar_select 0, %s10, %s8
  %12 = sst [smem:[#allocation3]] %s0
  %13 = sst [smem:[#allocation4]] %s1
  $region1: #{quant_act_forward.1} parent=0
    #allocation5 [shape = 'u8[512]{0}', space=smem, size = 0x200, scoped, tag = 'output window, operand 1, single buffered']
    #allocation6 [shape = 's32[1]{0}', space=sflag, size = 0x4, scoped, tag = 'scoped memory for quant_act_forward.1']
    #allocation7 [shape = 'u8[512]{0}', space=smem, size = 0x200, scoped, tag = 'output window, operand 2, single buffered']
    #allocation8 [shape = 's32[1]{0}', space=sflag, size = 0x4, scoped, tag = 'scoped memory for quant_act_forward.1']
    #allocation9 [shape = 'u8[512]{0}', space=smem, size = 0x200, scoped, tag = 'output window, operand 3, single buffered']
    %14 = vsyncpa [#allocation6], 0
    %15 = vsyncpa [#allocation8], 0
    // Predicated region
    $region2: #{quant_act_forward.1} parent=1 // pred_check
      _
    $region3: #{quant_act_forward.1} parent=1 // pred_check_branch
      %17 = sbr.rel (0) target = $region5
    $region4: #{quant_act_forward.1} parent=1 // pred_region
      _
    $region5: #{quant_act_forward.1} parent=1 // pred_fallthru
      _
    %s18 = sld [smem:[#allocation3]]
    %s19 = sld [smem:[#allocation4]]
    %v20 = vld [vmem:[%s2] sm:$0xff]
    %v21 = vld [vmem:[%s2 + $0x8] sm:$0xff]
    %v22 = vld [vmem:[%s2 + $0x10] sm:$0xff]
    %v23 = vld [vmem:[%s2 + $0x18] sm:$0xff]
    %v24 = vmin.f32 %v20, %v21
    %v25 = vmin.f32 %v22, %v23
    %v26 = vmin.f32 %v24, %v25
    %27 = vmin.xlane.f32.xlu0 %v26
    %v28 = vpop.xlane.xlu0 %27
    %v29 = vrot.slane %v28, 4
    %v30 = vmin.f32 %v28, %v29
    %v31 = vrot.slane %v30, 2
    %v32 = vmin.f32 %v30, %v31
    %v33 = vrot.slane %v32, 1
    %v34 = vmin.f32 %v32, %v33
    %s35 = vtos %v34
    %v36 = vmax.f32 %v20, %v21
    %v37 = vmax.f32 %v22, %v23
    %v38 = vmax.f32 %v36, %v37
    %39 = vmax.xlane.f32.xlu0 %v38
    %v40 = vpop.xlane.xlu0 %39
    %v41 = vrot.slane %v40, 4
    %v42 = vmax.f32 %v40, %v41
    %v43 = vrot.slane %v42, 2
    %v44 = vmax.f32 %v42, %v43
    %v45 = vrot.slane %v44, 1
    %v46 = vmax.f32 %v44, %v45
    %s47 = vtos %v46
    %p48 = scmp.eq.f32.partialorder %s18, %s19
    %s49 = sadd.f32 %s18, %s35
    %s50 = smul.f32 %s18, 0.99
    %s51 = smul.f32 %s35, 0.01
    %s52 = sadd.f32 %s50, %s51
    %s53 = scalar_select %p48, %s49, %s52
    %s54 = sadd.f32 %s19, %s47
    %s55 = smul.f32 %s19, 0.99
    %s56 = smul.f32 %s47, 0.01
    %s57 = sadd.f32 %s55, %s56
    %s58 = scalar_select %p48, %s54, %s57
    %s59 = sand.u32 2147483647, %s53
    %s60 = sand.u32 2147483647, %s58
    %s61 = smax.f32 %s59, %s60
    %s62 = smax.f32 %s61, 1e-08
    %v63 = vrcp.pop 127.0
    %s64 = vtos %v63
    %s65 = smul.f32 %s62, %s64
    %s66 = scalar_lea.smem [#allocation5], 0
    %67 = sst [smem:[%s66]] %s53
    %s68 = scalar_lea.smem [#allocation7], 0
    %69 = sst [smem:[%s68]] %s58
    %s70 = scalar_lea.smem [#allocation9], 0
    %71 = sst [smem:[%s70]] %s65
    %v72 = vstv %s65
    %v73 = vrcp.pop %v72
    %v74 = vmul.f32 %v20, %v73
    %v75 = vmul.f32 %v21, %v73
    %v76 = vmul.f32 %v22, %v73
    %v77 = vmul.f32 %v23, %v73
    %v78 = vround.ne.pseudo %v74
    %v79 = vround.ne.pseudo %v75
    %v80 = vround.ne.pseudo %v76
    %v81 = vround.ne.pseudo %v77
    %v82 = vmax.f32 %v78, -128.0
    %v83 = vmax.f32 %v79, -128.0
    %v84 = vmax.f32 %v80, -128.0
    %v85 = vmax.f32 %v81, -128.0
    %v86 = vmin.f32 %v82, 127.0
    %v87 = vmin.f32 %v83, 127.0
    %v88 = vmin.f32 %v84, 127.0
    %v89 = vmin.f32 %v85, 127.0
    %v90 = vmul.f32 %v86, %v72
    %v91 = vmul.f32 %v87, %v72
    %v92 = vmul.f32 %v88, %v72
    %v93 = vmul.f32 %v89, %v72
    %94 = vst [vmem:[%s3] sm:$0xff] %v90
    %95 = vst [vmem:[%s3 + $0x8] sm:$0xff] %v91
    %96 = vst [vmem:[%s3 + $0x10] sm:$0xff] %v92
    %97 = vst [vmem:[%s3 + $0x18] sm:$0xff] %v93
    // Predicated region
    $region6: #{quant_act_forward.1} parent=1 // pred_check
      _
    $region7: #{quant_act_forward.1} parent=1 // pred_check_branch
      %99 = sbr.rel (0) target = $region9
    $region8: #{quant_act_forward.1} parent=1 // pred_region
      _
    $region9: #{quant_act_forward.1} parent=1 // pred_fallthru
      _
    // Predicated region
    $region10: #{quant_act_forward.1} parent=1 // pred_check
      _
    $region11: #{quant_act_forward.1} parent=1 // pred_check_branch
      %101 = sbr.rel (0) target = $region13
    $region12: #{quant_act_forward.1} parent=1 // pred_region
      %s103 = ssub.s32 16, 16
      %104 = vsyncadd [#allocation6], %s103
      %107 = dma.smem_to_hbm [#allocation5], 16, %s4, [#allocation6]
    $region13: #{quant_act_forward.1} parent=1 // pred_fallthru
      _
    // Predicated region
    $region14: #{quant_act_forward.1} parent=1 // pred_check
      _
    $region15: #{quant_act_forward.1} parent=1 // pred_check_branch
      %109 = sbr.rel (0) target = $region17
    $region16: #{quant_act_forward.1} parent=1 // pred_region
      %s111 = ssub.s32 16, 16
      %112 = vsyncadd [#allocation8], %s111
      %115 = dma.smem_to_hbm [#allocation7], 16, %s5, [#allocation8]
    $region17: #{quant_act_forward.1} parent=1 // pred_fallthru
      _
    // Predicated region
    $region18: #{quant_act_forward.1} parent=1 // pred_check
      _
    $region19: #{quant_act_forward.1} parent=1 // pred_check_branch
      %117 = sbr.rel (0) target = $region21
    $region20: #{quant_act_forward.1} parent=1 // pred_region
      %s119 = ssub.s32 16, 16
      %120 = vsyncadd [#allocation8], %s119
      %123 = dma.smem_to_hbm [#allocation9], 16, %s6, [#allocation8]
    $region21: #{quant_act_forward.1} parent=1 // pred_fallthru
      _
    // Predicated region
    $region22: #{quant_act_forward.1} parent=1 // pred_check
      _
    $region23: #{quant_act_forward.1} parent=1 // pred_check_branch
      %125 = sbr.rel (0) target = $region25
    $region24: #{quant_act_forward.1} parent=1 // pred_region
      _
    $region25: #{quant_act_forward.1} parent=1 // pred_fallthru
      _
    // Predicated region
    $region26: #{quant_act_forward.1} parent=1 // pred_check
      _
    $region27: #{quant_act_forward.1} parent=1 // pred_check_branch
      %127 = sbr.rel (0) target = $region29
    $region28: #{quant_act_forward.1} parent=1 // pred_region
      %128 = dma.done [#allocation6], 16
    $region29: #{quant_act_forward.1} parent=1 // pred_fallthru
      _
    // Predicated region
    $region30: #{quant_act_forward.1} parent=1 // pred_check
      _
    $region31: #{quant_act_forward.1} parent=1 // pred_check_branch
      %130 = sbr.rel (0) target = $region33
    $region32: #{quant_act_forward.1} parent=1 // pred_region
      %131 = dma.done [#allocation8], 16
    $region33: #{quant_act_forward.1} parent=1 // pred_fallthru
      _
    // Predicated region
    $region34: #{quant_act_forward.1} parent=1 // pred_check
      _
    $region35: #{quant_act_forward.1} parent=1 // pred_check_branch
      %133 = sbr.rel (0) target = $region37
    $region36: #{quant_act_forward.1} parent=1 // pred_region
      %134 = dma.done [#allocation8], 16
    $region37: #{quant_act_forward.1} parent=1 // pred_fallthru
      _
    %135 = sfence
    %136 = vsyncpa [#allocation6], 1
    %137 = vsyncpa [#allocation8], 1

</llo_original>
